<compile_context>
chip_gen: v6e
topology: v6e:2x2x1
jax: 0.10.0
libtpu: 0.0.40
codegen_flags: <defaults>
</compile_context>

<pallas_src>
import functools

import jax
import jax.numpy as jnp
from jax.experimental import pallas as pl
from jax.experimental.pallas import tpu as pltpu


def _round_up(x, m):
    return (x + m - 1) // m * m


def _focal_loss_kernel(x_ref, tgt_ref, alpha_ref, out_ref, acc_ref, *,
                       n_valid, gamma, scale, needs_mask):
    i = pl.program_id(0)

    @pl.when(i == 0)
    def _init():
        acc_ref[...] = jnp.zeros_like(acc_ref)

    # (C, TN): class axis on sublanes, batch samples on the lane axis.
    x = x_ref[...].astype(jnp.float32)
    C, tn = x.shape

    ids = tgt_ref[...]                                           # (1, TN) int32
    row = jax.lax.broadcasted_iota(jnp.int32, (C, tn), 0)
    mask = (row == ids).astype(jnp.float32)                      # one-hot / sample

    # target log-prob via log-softmax over the class axis (axis 0)
    m = jnp.max(x, axis=0, keepdims=True)                        # (1, TN)
    s = jnp.sum(jnp.exp(x - m), axis=0, keepdims=True)           # (1, TN)
    x_t = jnp.sum(x * mask, axis=0, keepdims=True)               # (1, TN)
    log_p = (x_t - m) - jnp.log(s)                               # (1, TN)
    probs = jnp.exp(log_p)                                       # (1, TN)

    # per-sample alpha gather; alpha_ref is (C, 1), broadcasts over lanes
    alpha_t = jnp.sum(mask * alpha_ref[...], axis=0, keepdims=True)

    one_minus = 1.0 - probs
    focal = one_minus * one_minus if gamma == 2 else one_minus ** gamma
    batch_loss = -alpha_t * focal * log_p                        # (1, TN)

    if needs_mask:
        # mask out padded batch columns (only emitted when N % TN != 0)
        col = jax.lax.broadcasted_iota(jnp.int32, (1, tn), 1) + i * tn
        batch_loss = jnp.where(col < n_valid, batch_loss, 0.0)

    acc_ref[...] = acc_ref[...] + jnp.sum(batch_loss)

    @pl.when(i == pl.num_programs(0) - 1)
    def _finalize():
        out_ref[...] = acc_ref[...] * jnp.float32(scale)


def domain_focal_loss(inputs, targets, alpha, *, gamma=2, size_average=True):
    """inputs: (N, C) logits; targets: (N,) int class ids; alpha: (C,) weights."""
    N, C = inputs.shape

    # Lane-dense tile over batch: ~1 MiB f32 logits block per buffer (cap 65536
    # lanes), rounded to the 128-lane requirement; single block for small N.
    tn_cap = max(128, min(65536, ((1 << 20) // max(4 * C, 1)) // 128 * 128))
    tn = min(tn_cap, _round_up(N, 128))
    n_pad = _round_up(N, tn)
    grid = (n_pad // tn,)

    # Transpose to (C, N) and pad the batch axis (padded samples masked in-kernel).
    x_t = jnp.pad(inputs.T, ((0, 0), (0, n_pad - N)))            # keep input dtype
    tgt = jnp.pad(targets.astype(jnp.int32).reshape(1, N),
                  ((0, 0), (0, n_pad - N)))
    alpha2d = jnp.asarray(alpha, jnp.float32).reshape(C, 1)

    kernel = functools.partial(
        _focal_loss_kernel,
        n_valid=N,
        gamma=gamma,
        scale=(1.0 / N) if size_average else 1.0,
        needs_mask=(n_pad != N),
    )

    out = pl.pallas_call(
        kernel,
        out_shape=jax.ShapeDtypeStruct((1, 1), jnp.float32),
        grid_spec=pltpu.PrefetchScalarGridSpec(
            num_scalar_prefetch=0,
            grid=grid,
            in_specs=[
                pl.BlockSpec((C, tn), lambda i: (0, i)),   # logits tile
                pl.BlockSpec((1, tn), lambda i: (0, i)),   # targets tile
                pl.BlockSpec((C, 1), lambda i: (0, 0)),    # alpha (resident)
            ],
            out_specs=pl.BlockSpec((1, 1), lambda i: (0, 0)),
            scratch_shapes=[pltpu.VMEM((1, 1), jnp.float32)],
        ),
        compiler_params=pltpu.CompilerParams(
            dimension_semantics=("arbitrary",)),
    )(x_t, tgt, alpha2d)
    return out[0, 0]


def _reference(inputs, targets, alpha, gamma=2):
    P = jax.nn.softmax(inputs.astype(jnp.float32), axis=1)
    onehot = jax.nn.one_hot(targets, inputs.shape[1], dtype=jnp.float32)
    probs = jnp.sum(P * onehot, axis=1)
    a = alpha[targets]
    batch_loss = -a * (1.0 - probs) ** gamma * jnp.log(probs)
    return jnp.mean(batch_loss)


if __name__ == "__main__":
    key = jax.random.PRNGKey(0)
    k1, k2 = jax.random.split(key)

    N, class_num = 8, 4
    inputs = jax.random.normal(k1, (N, class_num), dtype=jnp.float32)
    targets = jax.random.randint(k2, (N,), 0, class_num, dtype=jnp.int32)
    # alpha = ones(class_num, 1) as in __init__ with alpha=None
    alpha = jnp.ones((class_num,), dtype=jnp.float32)

    loss = domain_focal_loss(inputs, targets, alpha)
    jax.block_until_ready(loss)

    ref = _reference(inputs, targets, alpha)
    assert jnp.allclose(loss, ref, atol=1e-5, rtol=1e-5), (loss, ref)

    print("KERNEL_OK")
</pallas_src>

<mosaic_0001>
module attributes {stable_mosaic.version = 11 : i64} {
  func.func @_focal_loss_kernel(%arg0: i32, %arg1: memref<4x128xf32, #tpu.memory_space<vmem>>, %arg2: memref<1x128xi32, #tpu.memory_space<vmem>>, %arg3: memref<4x1xf32, #tpu.memory_space<vmem>>, %arg4: memref<1x1xf32, #tpu.memory_space<vmem>>, %arg5: memref<1x1xf32, #tpu.memory_space<vmem>>) attributes {dimension_semantics = [#tpu.dimension_semantics<arbitrary>], iteration_bounds = array<i64: 1>, scalar_prefetch = 0 : i64, scratch_operands = 1 : i64, tpu.core_type = #tpu.core_type<tc>, window_params = [{transform_indices = @transform_0, window_bounds = array<i64: 4, 128>}, {transform_indices = @transform_1, window_bounds = array<i64: 1, 128>}, {pipeline_mode = #tpu.pipeline_mode<synchronous>, transform_indices = @transform_2, window_bounds = array<i64: 4, 1>}, {pipeline_mode = #tpu.pipeline_mode<synchronous>, transform_indices = @transform_3, window_bounds = array<i64: 1, 1>}]} {
    %c0_i32 = arith.constant 0 : i32
    %0 = arith.cmpi eq, %arg0, %c0_i32 : i32
    %1 = arith.extui %0 : i1 to i32
    %c0_i32_0 = arith.constant 0 : i32
    %2 = arith.cmpi ne, %1, %c0_i32_0 : i32
    scf.if %2 {
      %cst_19 = arith.constant 0.000000e+00 : f32
      %55 = vector.broadcast %cst_19 : f32 to vector<1x1xf32>
      %c0_20 = arith.constant 0 : index
      %c0_21 = arith.constant 0 : index
      %56 = vector.load %arg5[%c0_20, %c0_21] : memref<1x1xf32, #tpu.memory_space<vmem>>, vector<1x1xf32>
      tpu.vector_store %arg5[%c0_20, %c0_21], %55 {strides = array<i32>} : memref<1x1xf32, #tpu.memory_space<vmem>>, vector<1x1xf32>,
    } else {
    }
    %c0 = arith.constant 0 : index
    %c0_1 = arith.constant 0 : index
    %3 = vector.load %arg1[%c0, %c0_1] : memref<4x128xf32, #tpu.memory_space<vmem>>, vector<4x128xf32>
    %c0_2 = arith.constant 0 : index
    %c0_3 = arith.constant 0 : index
    %4 = vector.load %arg2[%c0_2, %c0_3] : memref<1x128xi32, #tpu.memory_space<vmem>>, vector<1x128xi32>
    %5 = tpu.iota {dimensions = array<i32: 0>} : vector<4x128xi32>
    %6 = vector.broadcast %4 : vector<1x128xi32> to vector<4x128xi32>
    %7 = arith.cmpi eq, %5, %6 : vector<4x128xi32>
    %8 = arith.extui %7 : vector<4x128xi1> to vector<4x128xi32>
    %9 = arith.sitofp %8 : vector<4x128xi32> to vector<4x128xf32>
    %cst = arith.constant dense<0xFF800000> : vector<128xf32>
    %10 = vector.multi_reduction <maximumf>, %3, %cst [0] : vector<4x128xf32> to vector<128xf32>
    %11 = vector.shape_cast %10 : vector<128xf32> to vector<1x128xf32>
    %12 = vector.broadcast %11 : vector<1x128xf32> to vector<4x128xf32>
    %13 = arith.subf %3, %12 : vector<4x128xf32>
    %14 = math.exp %13 : vector<4x128xf32>
    %cst_4 = arith.constant dense<0.000000e+00> : vector<128xf32>
    %15 = vector.multi_reduction <add>, %14, %cst_4 [0] : vector<4x128xf32> to vector<128xf32>
    %16 = vector.shape_cast %15 : vector<128xf32> to vector<1x128xf32>
    %17 = arith.mulf %3, %9 : vector<4x128xf32>
    %cst_5 = arith.constant dense<0.000000e+00> : vector<128xf32>
    %18 = vector.multi_reduction <add>, %17, %cst_5 [0] : vector<4x128xf32> to vector<128xf32>
    %19 = vector.shape_cast %18 : vector<128xf32> to vector<1x128xf32>
    %20 = arith.subf %19, %11 : vector<1x128xf32>
    %21 = math.log %16 : vector<1x128xf32>
    %22 = arith.subf %20, %21 : vector<1x128xf32>
    %23 = math.exp %22 : vector<1x128xf32>
    %c0_6 = arith.constant 0 : index
    %c0_7 = arith.constant 0 : index
    %24 = vector.load %arg3[%c0_6, %c0_7] : memref<4x1xf32, #tpu.memory_space<vmem>>, vector<4x1xf32>
    %25 = vector.broadcast %24 : vector<4x1xf32> to vector<4x128xf32>
    %26 = arith.mulf %9, %25 : vector<4x128xf32>
    %cst_8 = arith.constant dense<0.000000e+00> : vector<128xf32>
    %27 = vector.multi_reduction <add>, %26, %cst_8 [0] : vector<4x128xf32> to vector<128xf32>
    %28 = vector.shape_cast %27 : vector<128xf32> to vector<1x128xf32>
    %cst_9 = arith.constant 1.000000e+00 : f32
    %29 = vector.broadcast %cst_9 : f32 to vector<1x128xf32>
    %30 = arith.subf %29, %23 : vector<1x128xf32>
    %31 = arith.mulf %30, %30 : vector<1x128xf32>
    %cst_10 = arith.constant 0.000000e+00 : f32
    %32 = vector.broadcast %cst_10 : f32 to vector<1x128xf32>
    %33 = arith.subf %32, %28 : vector<1x128xf32>
    %34 = arith.mulf %33, %31 : vector<1x128xf32>
    %35 = arith.mulf %34, %22 : vector<1x128xf32>
    %36 = tpu.iota {dimensions = array<i32: 1>} : vector<1x128xi32>
    %c128_i32 = arith.constant 128 : i32
    %37 = arith.muli %arg0, %c128_i32 : i32
    %38 = vector.broadcast %37 : i32 to vector<1x128xi32>
    %39 = arith.addi %36, %38 : vector<1x128xi32>
    %c8_i32 = arith.constant 8 : i32
    %40 = vector.broadcast %c8_i32 : i32 to vector<1x128xi32>
    %41 = arith.cmpi slt, %39, %40 : vector<1x128xi32>
    %cst_11 = arith.constant 0.000000e+00 : f32
    %42 = vector.broadcast %cst_11 : f32 to vector<1x128xf32>
    %43 = arith.select %41, %35, %42 : vector<1x128xi1>, vector<1x128xf32>
    %c0_12 = arith.constant 0 : index
    %c0_13 = arith.constant 0 : index
    %44 = vector.load %arg5[%c0_12, %c0_13] : memref<1x1xf32, #tpu.memory_space<vmem>>, vector<1x1xf32>
    %45 = vector.shape_cast %43 : vector<1x128xf32> to vector<1x1x128xf32>
    %cst_14 = arith.constant dense<0.000000e+00> : vector<1xf32>
    %46 = vector.multi_reduction <add>, %45, %cst_14 [1, 2] : vector<1x1x128xf32> to vector<1xf32>
    %47 = vector.shape_cast %46 : vector<1xf32> to vector<1x1x1xf32>
    %48 = vector.extract %47[0, 0, 0] : f32 from vector<1x1x1xf32>
    %49 = vector.broadcast %48 : f32 to vector<1x1xf32>
    %50 = arith.addf %44, %49 : vector<1x1xf32>
    %c0_15 = arith.constant 0 : index
    %c0_16 = arith.constant 0 : index
    %51 = vector.load %arg5[%c0_15, %c0_16] : memref<1x1xf32, #tpu.memory_space<vmem>>, vector<1x1xf32>
    tpu.vector_store %arg5[%c0_15, %c0_16], %50 {strides = array<i32>} : memref<1x1xf32, #tpu.memory_space<vmem>>, vector<1x1xf32>,
    %c0_i32_17 = arith.constant 0 : i32
    %52 = arith.cmpi eq, %arg0, %c0_i32_17 : i32
    %53 = arith.extui %52 : i1 to i32
    %c0_i32_18 = arith.constant 0 : i32
    %54 = arith.cmpi ne, %53, %c0_i32_18 : i32
    scf.if %54 {
      %c0_19 = arith.constant 0 : index
      %c0_20 = arith.constant 0 : index
      %55 = vector.load %arg5[%c0_19, %c0_20] : memref<1x1xf32, #tpu.memory_space<vmem>>, vector<1x1xf32>
      %cst_21 = arith.constant 1.250000e-01 : f32
      %56 = vector.broadcast %cst_21 : f32 to vector<1x1xf32>
      %57 = arith.mulf %55, %56 : vector<1x1xf32>
      %c0_22 = arith.constant 0 : index
      %c0_23 = arith.constant 0 : index
      %58 = vector.load %arg4[%c0_22, %c0_23] : memref<1x1xf32, #tpu.memory_space<vmem>>, vector<1x1xf32>
      tpu.vector_store %arg4[%c0_22, %c0_23], %57 {strides = array<i32>} : memref<1x1xf32, #tpu.memory_space<vmem>>, vector<1x1xf32>,
    } else {
    }
    return
  }
  func.func @transform_0(%arg0: i32) -> (i32, i32) {
    %c0_i32 = arith.constant 0 : i32
    %c0_i32_0 = arith.constant 0 : i32
    return %c0_i32, %arg0 : i32, i32
  }
  func.func @transform_1(%arg0: i32) -> (i32, i32) {
    %c0_i32 = arith.constant 0 : i32
    %c0_i32_0 = arith.constant 0 : i32
    return %c0_i32, %arg0 : i32, i32
  }
  func.func @transform_2(%arg0: i32) -> (i32, i32) {
    %c0_i32 = arith.constant 0 : i32
    %c0_i32_0 = arith.constant 0 : i32
    %c0_i32_1 = arith.constant 0 : i32
    return %c0_i32, %c0_i32_0 : i32, i32
  }
  func.func @transform_3(%arg0: i32) -> (i32, i32) {
    %c0_i32 = arith.constant 0 : i32
    %c0_i32_0 = arith.constant 0 : i32
    %c0_i32_1 = arith.constant 0 : i32
    return %c0_i32, %c0_i32_0 : i32, i32
  }
}

</mosaic_0001>

<llo_original>
// kernel: tpu_custom_call.1
$region0: #{tpu_custom_call.1}
  #allocation0 [shape = 'u32[]', space=smem, size = 0x4, offset = 0x4, fixed_abs, tag = 'smem constant byte address 0x4 - core index']
  #allocation1 [shape = 'u32[144,128]{1,0:T(1,128)}', space=vmem, size = 0x12000, scoped, tag = 'internal scratch']
  #allocation2 [shape = 'f32[1,1]{1,0:T(1,128)}', space=vmem, size = 0x200, scoped, tag = 'scratch operand']
  %s0 = inlined_call_operand.vmem [shape: f32[4,128], index: 0, kind: input, shape index: {}]
  %s1 = inlined_call_operand.vmem [shape: s32[1,128], index: 1, kind: input, shape index: {}]
  %s2 = inlined_call_operand.vmem [shape: f32[4,1], index: 2, kind: input, shape index: {}]
  %s3 = inlined_call_operand.hbm [shape: f32[1,1], index: 3, kind: output, shape index: {}]
  %s4 = sld [smem:[#allocation0]]
  $region30: #{tpu_custom_call.1} parent=0
    _
  %s6 = ssub.s32 1, %s4
  %s7 = scalar_select 0, %s6, %s4
  $region1: #{tpu_custom_call.1} parent=0
    #allocation3 [shape = 'u8[512]{0}', space=vmem, size = 0x400, scoped, tag = 'output window, operand 0, single buffered']
    #allocation4 [shape = 's32[1]{0}', space=sflag, size = 0x4, scoped, tag = 'scoped memory for tpu_custom_call.1']
    %8 = vsyncpa [#allocation4], 0
    // Predicated region
    $region2: #{tpu_custom_call.1} parent=1 // pred_check
      _
    $region3: #{tpu_custom_call.1} parent=1 // pred_check_branch
      %10 = sbr.rel (0) target = $region5
    $region4: #{tpu_custom_call.1} parent=1 // pred_region
      _
    $region5: #{tpu_custom_call.1} parent=1 // pred_fallthru
      _
    // Predicated region
    $region6: #{tpu_custom_call.1} parent=1 // pred_check
      _
    $region7: #{tpu_custom_call.1} parent=1 // pred_check_branch
      %12 = sbr.rel (0) target = $region9
    $region8: #{tpu_custom_call.1} parent=1 // pred_region
      _
    $region9: #{tpu_custom_call.1} parent=1 // pred_fallthru
      _
    // Predicated region
    $region10: #{tpu_custom_call.1} parent=1 // pred_check
      _
    $region11: #{tpu_custom_call.1} parent=1 // pred_check_branch
      %14 = sbr.rel (0) target = $region13
    $region12: #{tpu_custom_call.1} parent=1 // pred_region
      _
    $region13: #{tpu_custom_call.1} parent=1 // pred_fallthru
      _
    %p15 = scmp.eq.s32.totalorder 0, 0
    // Predicated region
    $region14: #{tpu_custom_call.1} parent=1 // pred_check
      %p16 = pneg %p15
    $region15: #{tpu_custom_call.1} parent=1 // pred_check_branch
      %18 = sbr.rel (%p16) target = $region17
    $region16: #{tpu_custom_call.1} parent=1 // pred_region
      %vm19 = vcmask 0
      %20 = vst.msk [vmem:[#allocation2] sm:$0x1] %vm19, 0.0
    $region17: #{tpu_custom_call.1} parent=1 // pred_fallthru
      _
    %v21 = vld [vmem:[%s0] sm:$0xf]
    %v22 = vld [vmem:[%s1] sm:$0x1]
    %v23 = vlaneseq
    %v24 = vshrl.u32 %v23, 7
    %v25 = vlaneseq
    %v26 = vshrl.u32 %v25, 7
    %v27 = vsub.s32 0, %v26
    %v28 = vrot.slane %v22, %v27
    %vm29 = vcmp.eq.s32.totalorder %v24, %v28
    %v30 = vsel %vm29, 1, 0
    %v31 = vcvt.s32.f32 %v30
    %vm32 = vcmask 1043456
    %v33 = vsel %vm32, %v21, -inf
    %v34 = vrot.slane %v33, 4
    %v35 = vmax.f32 %v33, %v34
    %v36 = vrot.slane %v35, 2
    %v37 = vmax.f32 %v35, %v36
    %v38 = vrot.slane %v37, 1
    %v39 = vmax.f32 %v37, %v38
    %v40 = vsub.f32 %v21, %v39
    %v41 = vmul.f32 %v40, 1.442695
    %v42 = vpow.pop %v41
    %v43 = vsel %vm32, %v42, 0.0
    %v44 = vrot.slane %v43, 4
    %v45 = vadd.f32 %v43, %v44
    %v46 = vrot.slane %v45, 2
    %v47 = vadd.f32 %v45, %v46
    %v48 = vrot.slane %v47, 1
    %v49 = vadd.f32 %v47, %v48
    %v50 = vmul.f32 %v21, %v31
    %v51 = vsel %vm32, %v50, 0.0
    %v52 = vrot.slane %v51, 4
    %v53 = vadd.f32 %v51, %v52
    %v54 = vrot.slane %v53, 2
    %v55 = vadd.f32 %v53, %v54
    %v56 = vrot.slane %v55, 1
    %v57 = vadd.f32 %v55, %v56
    %v58 = vsub.f32 %v57, %v39
    %v59 = vlog2.pop %v49
    %v60 = vmul.f32 %v59, 0.6931472
    %v61 = vsub.f32 %v58, %v60
    %v62 = vmul.f32 %v61, 1.442695
    %v63 = vpow.pop %v62
    %v64 = vld [vmem:[%s2] sm:$0xf]
    %66 = vset.pattern.permute.xlu0 0
    %67 = vperm.xlu0 %66, %v64
    %v68 = vpop.permute.xlu0 %67
    %v70 = vmul.f32 %v31, %v68
    %v71 = vsel %vm32, %v70, 0.0
    %v72 = vrot.slane %v71, 4
    %v73 = vadd.f32 %v71, %v72
    %v74 = vrot.slane %v73, 2
    %v75 = vadd.f32 %v73, %v74
    %v76 = vrot.slane %v75, 1
    %v77 = vadd.f32 %v75, %v76
    %v78 = vsub.f32 1.0, %v63
    %v79 = vmul.f32 %v78, %v78
    %v80 = vsub.f32 0.0, %v77
    %v81 = vmul.f32 %v80, %v79
    %v82 = vmul.f32 %v81, %v61
    %v83 = vlaneseq
    %v84 = vand.u32 %v83, 127
    %s85 = smul.u32 0, 128
    %v86 = vstv %s85
    %v87 = vadd.s32 %v84, %v86
    %vm88 = vcmp.lt.s32.totalorder %v87, 8
    %v89 = vsel %vm88, %v82, 0.0
    %v90 = vld [vmem:[#allocation2] sm:$0x1]
    %vm91 = vcmask 1040384
    %v92 = vsel %vm91, %v89, 0.0
    %93 = vadd.xlane.f32.xlu0 %v92
    %v94 = vpop.xlane.xlu0 %93
    %v95 = vrot.slane %v94, 4
    %v96 = vadd.f32 %v94, %v95
    %v97 = vrot.slane %v96, 2
    %v98 = vadd.f32 %v96, %v97
    %v99 = vrot.slane %v98, 1
    %v100 = vadd.f32 %v98, %v99
    %s101 = vtos %v100
    %v102 = vstv %s101
    %v103 = vadd.f32 %v90, %v102
    %vm104 = vcmask 0
    %105 = vst.msk [vmem:[#allocation2] sm:$0x1] %vm104, %v103
    // Predicated region
    $region18: #{tpu_custom_call.1} parent=1 // pred_check
      %p106 = pneg %p15
    $region19: #{tpu_custom_call.1} parent=1 // pred_check_branch
      %108 = sbr.rel (%p106) target = $region21
    $region20: #{tpu_custom_call.1} parent=1 // pred_region
      %v109 = vld [vmem:[#allocation2] sm:$0x1]
      %v110 = vmul.f32 %v109, 0.125
      %111 = vst.msk [vmem:[#allocation3] sm:$0x1] %vm104, %v110
    $region21: #{tpu_custom_call.1} parent=1 // pred_fallthru
      _
    // Predicated region
    $region22: #{tpu_custom_call.1} parent=1 // pred_check
      _
    $region23: #{tpu_custom_call.1} parent=1 // pred_check_branch
      %113 = sbr.rel (0) target = $region25
    $region24: #{tpu_custom_call.1} parent=1 // pred_region
      %s115 = ssub.s32 16, 16
      %116 = vsyncadd [#allocation4], %s115
      %s118 = sshll.u32 [#allocation3], 4
      %s119 = int_to_ptr.vmem [resolvable:$true] %s118
      %121 = dma.vmem_to_hbm [thread:$0]  %s119, 16, %s3, [#allocation4]
    $region25: #{tpu_custom_call.1} parent=1 // pred_fallthru
      _
    // Predicated region
    $region26: #{tpu_custom_call.1} parent=1 // pred_check
      _
    $region27: #{tpu_custom_call.1} parent=1 // pred_check_branch
      %123 = sbr.rel (0) target = $region29
    $region28: #{tpu_custom_call.1} parent=1 // pred_region
      %124 = dma.done [#allocation4], 16
    $region29: #{tpu_custom_call.1} parent=1 // pred_fallthru
      _
    %125 = vsyncpa [#allocation4], 1

</llo_original>
